<compile_context>
chip_gen: v5e
topology: v5e:2x2
jax: 0.10.0
libtpu: 0.0.40
codegen_flags: <defaults>
</compile_context>

<pallas_src>
import jax
import jax.numpy as jnp
from jax.experimental import pallas as pl
from jax.experimental.pallas import tpu as pltpu


BN_EPS = 1e-5
TB_MAX = 512          # batch tile upper bound (feedback: 256-1024 rows, VMEM permitting)
_MIB = 1024 * 1024


def _round_up(n, m):
    return ((n + m - 1) // m) * m


def _padded_tile_bytes(shape, dtype):
    """Rough VMEM footprint of one buffer after (8,128) tiling."""
    r = _round_up(max(int(shape[0]), 1), 8)
    c = _round_up(max(int(shape[1]), 1), 128)
    return r * c * jnp.dtype(dtype).itemsize


def _vae_kernel(
    x_ref, eps_ref,
    w1_ref, b1_ref,          # input_enc with batch_norm_enc folded in
    wml_ref, bml_ref,        # fused [mu_enc | logvar_enc]
    w2_ref, b2_ref,          # latent_dec with batch_norm_dec folded in
    w3_ref, b3_ref,          # out_dec
    out_ref,                 # [TB, input_dim + 2*latent_dim]  = [x_hat | mu | logvar]
):
    input_dim = x_ref.shape[1]
    latent_dim = eps_ref.shape[1]

    x = x_ref[...]  # f32 (TB, input_dim)

    # ---- encode: Linear + folded BN + ReLU (Dropout = identity in eval) ----
    h = jnp.dot(x.astype(jnp.bfloat16), w1_ref[...],
                preferred_element_type=jnp.float32) + b1_ref[...]
    h = jnp.maximum(h, 0.0)

    # ---- fused mu | logvar head: one MXU pass over h ----
    ml = jnp.dot(h.astype(jnp.bfloat16), wml_ref[...],
                 preferred_element_type=jnp.float32) + bml_ref[...]
    mu = ml[:, :latent_dim]
    lv = ml[:, latent_dim:]

    # ---- reparameterize (kept in f32: v5e VPU/EUP have no bf16) ----
    z = mu + eps_ref[...] * jnp.exp(0.5 * lv)

    # ---- decode: Linear + folded BN + ReLU, then output Linear ----
    hd = jnp.dot(z.astype(jnp.bfloat16), w2_ref[...],
                 preferred_element_type=jnp.float32) + b2_ref[...]
    hd = jnp.maximum(hd, 0.0)
    x_hat = jnp.dot(hd.astype(jnp.bfloat16), w3_ref[...],
                    preferred_element_type=jnp.float32) + b3_ref[...]

    # ---- single lane-dense output slab ----
    out_ref[:, :input_dim] = x_hat
    out_ref[:, input_dim:] = ml


def init_vae_params(key, input_dim, intermediate_dim, latent_dim):
    """Deterministic synthetic parameter init (PyTorch-Linear-like uniform)."""
    def linear(key, fan_in, fan_out):
        kw, kb = jax.random.split(key)
        bound = 1.0 / jnp.sqrt(jnp.float32(fan_in))
        # Stored pre-transposed: [in, out]
        w = jax.random.uniform(kw, (fan_in, fan_out), jnp.float32, -bound, bound)
        b = jax.random.uniform(kb, (1, fan_out), jnp.float32, -bound, bound)
        return w, b

    keys = jax.random.split(key, 6)
    w1, b1 = linear(keys[0], input_dim, intermediate_dim)        # input_enc
    wmu, bmu = linear(keys[1], intermediate_dim, latent_dim)     # mu_enc
    wlv, blv = linear(keys[2], intermediate_dim, latent_dim)     # logvar_enc
    w2, b2 = linear(keys[3], latent_dim, intermediate_dim)       # latent_dec
    w3, b3 = linear(keys[4], intermediate_dim, input_dim)        # out_dec
    # y_dec is not used in forward(); omitted from the kernel.

    # BatchNorm1d params / running stats (fresh init, eval mode)
    g1 = jnp.ones((1, intermediate_dim), jnp.float32)
    be1 = jnp.zeros((1, intermediate_dim), jnp.float32)
    rm1 = jnp.zeros((1, intermediate_dim), jnp.float32)
    rv1 = jnp.ones((1, intermediate_dim), jnp.float32)
    g2 = jnp.ones((1, intermediate_dim), jnp.float32)
    be2 = jnp.zeros((1, intermediate_dim), jnp.float32)
    rm2 = jnp.zeros((1, intermediate_dim), jnp.float32)
    rv2 = jnp.ones((1, intermediate_dim), jnp.float32)

    return dict(
        w1=w1, b1=b1, g1=g1, be1=be1, rm1=rm1, rv1=rv1,
        wmu=wmu, bmu=bmu, wlv=wlv, blv=blv,
        w2=w2, b2=b2, g2=g2, be2=be2, rm2=rm2, rv2=rv2,
        w3=w3, b3=b3,
    )


@jax.jit
def vae_forward(x, eps, params):
    B, input_dim = x.shape
    intermediate_dim = params["w1"].shape[1]
    latent_dim = params["wmu"].shape[1]
    d_out = input_dim + 2 * latent_dim

    # ---- fold eval-mode BatchNorm into the preceding Linears (trace time) ----
    s1 = params["g1"] * jax.lax.rsqrt(params["rv1"] + BN_EPS)          # [1, inter]
    w1f = params["w1"] * s1
    b1f = (params["b1"] - params["rm1"]) * s1 + params["be1"]
    s2 = params["g2"] * jax.lax.rsqrt(params["rv2"] + BN_EPS)
    w2f = params["w2"] * s2
    b2f = (params["b2"] - params["rm2"]) * s2 + params["be2"]

    # ---- fuse mu / logvar heads into one weight / bias ----
    wml = jnp.concatenate([params["wmu"], params["wlv"]], axis=1)      # [inter, 2*latent]
    bml = jnp.concatenate([params["bmu"], params["blv"]], axis=1)      # [1, 2*latent]

    # ---- bf16 weights for the MXU (accumulation stays f32) ----
    w1f = w1f.astype(jnp.bfloat16)
    wml16 = wml.astype(jnp.bfloat16)
    w2f = w2f.astype(jnp.bfloat16)
    w3 = params["w3"].astype(jnp.bfloat16)
    b1f = b1f.astype(jnp.float32)
    bml = bml.astype(jnp.float32)
    b2f = b2f.astype(jnp.float32)
    b3 = params["b3"].astype(jnp.float32)

    # ---- batch tiling ----
    TB = min(_round_up(B, 8), TB_MAX)
    Bp = _round_up(B, TB)
    if Bp != B:
        x = jnp.pad(x, ((0, Bp - B), (0, 0)))
        eps = jnp.pad(eps, ((0, Bp - B), (0, 0)))
    grid = (pl.cdiv(Bp, TB),)

    weight_args = (w1f, b1f, wml16, bml, w2f, b2f, w3, b3)
    # Weights: full-array blocks with constant index_map -> fetched once, stay resident.
    weight_specs = [pl.BlockSpec(w.shape, lambda i: (0, 0)) for w in weight_args]

    in_specs = [
        pl.BlockSpec((TB, input_dim), lambda i: (i, 0)),   # x
        pl.BlockSpec((TB, latent_dim), lambda i: (i, 0)),  # eps
    ] + weight_specs
    out_spec = pl.BlockSpec((TB, d_out), lambda i: (i, 0))

    # ---- VMEM budget: weights + double-buffered activation/output tiles ----
    weight_bytes = sum(_padded_tile_bytes(w.shape, w.dtype) for w in weight_args)
    act_bytes = 2 * (
        _padded_tile_bytes((TB, input_dim), jnp.float32)
        + _padded_tile_bytes((TB, latent_dim), jnp.float32)
        + _padded_tile_bytes((TB, d_out), jnp.float32)
    )
    vmem_limit = int(min(64 * _MIB, max(8 * _MIB, 2 * (weight_bytes + act_bytes))))

    # ---- cost estimate (real flops / HBM bytes) for the XLA scheduler ----
    flops = 2 * Bp * (
        input_dim * intermediate_dim          # input_enc
        + intermediate_dim * 2 * latent_dim   # fused mu|logvar
        + latent_dim * intermediate_dim       # latent_dec
        + intermediate_dim * input_dim        # out_dec
    )
    bytes_accessed = (
        sum(w.size * w.dtype.itemsize for w in weight_args)
        + x.size * 4 + eps.size * 4 + Bp * d_out * 4
    )
    cost = pl.CostEstimate(flops=flops, transcendentals=Bp * latent_dim,
                           bytes_accessed=bytes_accessed)

    out = pl.pallas_call(
        _vae_kernel,
        out_shape=jax.ShapeDtypeStruct((Bp, d_out), jnp.float32),
        grid=grid,
        in_specs=in_specs,
        out_specs=out_spec,
        compiler_params=pltpu.CompilerParams(
            dimension_semantics=("parallel",),    # megacore sharding on v7x
            vmem_limit_bytes=vmem_limit,
        ),
        cost_estimate=cost,
    )(x, eps, *weight_args)

    out = out[:B]
    x_hat = out[:, :input_dim]
    mu = out[:, input_dim:input_dim + latent_dim]
    logvar = out[:, input_dim + latent_dim:]
    return x_hat, mu, logvar


def vae_forward_ref(x, eps, p):
    """Pure-JAX f32 reference (original, un-folded math) for correctness check."""
    h = x @ p["w1"] + p["b1"]
    h = (h - p["rm1"]) * jax.lax.rsqrt(p["rv1"] + BN_EPS) * p["g1"] + p["be1"]
    h = jnp.maximum(h, 0.0)
    mu = h @ p["wmu"] + p["bmu"]
    lv = h @ p["wlv"] + p["blv"]
    z = mu + eps * jnp.exp(0.5 * lv)
    hd = z @ p["w2"] + p["b2"]
    hd = (hd - p["rm2"]) * jax.lax.rsqrt(p["rv2"] + BN_EPS) * p["g2"] + p["be2"]
    hd = jnp.maximum(hd, 0.0)
    x_hat = hd @ p["w3"] + p["b3"]
    return x_hat, mu, lv


if __name__ == "__main__":
    B = 8
    input_dim = 32
    intermediate_dim = 64
    latent_dim = 16

    key = jax.random.PRNGKey(0)
    k_param, k_x, k_eps = jax.random.split(key, 3)

    params = init_vae_params(k_param, input_dim, intermediate_dim, latent_dim)
    x = jax.random.normal(k_x, (B, input_dim), jnp.float32)
    eps = jax.random.normal(k_eps, (B, latent_dim), jnp.float32)  # reparam noise

    x_hat, mu, logvar = vae_forward(x, eps, params)
    jax.block_until_ready((x_hat, mu, logvar))

    # sanity check against pure-JAX f32 reference (kernel uses bf16 weights -> looser tol)
    xr, mr, lr = vae_forward_ref(x, eps, params)
    assert jnp.allclose(x_hat, xr, atol=5e-2, rtol=5e-2)
    assert jnp.allclose(mu, mr, atol=5e-2, rtol=5e-2)
    assert jnp.allclose(logvar, lr, atol=5e-2, rtol=5e-2)

    print("KERNEL_OK")
</pallas_src>

<mosaic_0001>
module attributes {stable_mosaic.version = 11 : i64} {
  func.func @_vae_kernel(%arg0: i32, %arg1: memref<8x32xf32, #tpu.memory_space<vmem>>, %arg2: memref<8x16xf32, #tpu.memory_space<vmem>>, %arg3: memref<32x64xbf16, #tpu.memory_space<vmem>>, %arg4: memref<1x64xf32, #tpu.memory_space<vmem>>, %arg5: memref<64x32xbf16, #tpu.memory_space<vmem>>, %arg6: memref<1x32xf32, #tpu.memory_space<vmem>>, %arg7: memref<16x64xbf16, #tpu.memory_space<vmem>>, %arg8: memref<1x64xf32, #tpu.memory_space<vmem>>, %arg9: memref<64x32xbf16, #tpu.memory_space<vmem>>, %arg10: memref<1x32xf32, #tpu.memory_space<vmem>>, %arg11: memref<8x64xf32, #tpu.memory_space<vmem>>) attributes {dimension_semantics = [#tpu.dimension_semantics<parallel>], iteration_bounds = array<i64: 1>, scalar_prefetch = 0 : i64, scratch_operands = 0 : i64, tpu.core_type = #tpu.core_type<tc>, window_params = [{transform_indices = @transform_0, window_bounds = array<i64: 8, 32>}, {transform_indices = @transform_1, window_bounds = array<i64: 8, 16>}, {pipeline_mode = #tpu.pipeline_mode<synchronous>, transform_indices = @transform_2, window_bounds = array<i64: 32, 64>}, {pipeline_mode = #tpu.pipeline_mode<synchronous>, transform_indices = @transform_3, window_bounds = array<i64: 1, 64>}, {pipeline_mode = #tpu.pipeline_mode<synchronous>, transform_indices = @transform_4, window_bounds = array<i64: 64, 32>}, {pipeline_mode = #tpu.pipeline_mode<synchronous>, transform_indices = @transform_5, window_bounds = array<i64: 1, 32>}, {pipeline_mode = #tpu.pipeline_mode<synchronous>, transform_indices = @transform_6, window_bounds = array<i64: 16, 64>}, {pipeline_mode = #tpu.pipeline_mode<synchronous>, transform_indices = @transform_7, window_bounds = array<i64: 1, 64>}, {pipeline_mode = #tpu.pipeline_mode<synchronous>, transform_indices = @transform_8, window_bounds = array<i64: 64, 32>}, {pipeline_mode = #tpu.pipeline_mode<synchronous>, transform_indices = @transform_9, window_bounds = array<i64: 1, 32>}, {transform_indices = @transform_10, window_bounds = array<i64: 8, 64>}]} {
    %c0 = arith.constant 0 : index
    %c0_0 = arith.constant 0 : index
    %0 = vector.load %arg1[%c0, %c0_0] : memref<8x32xf32, #tpu.memory_space<vmem>>, vector<8x32xf32>
    %1 = arith.truncf %0 : vector<8x32xf32> to vector<8x32xbf16>
    %c0_1 = arith.constant 0 : index
    %c0_2 = arith.constant 0 : index
    %2 = vector.load %arg3[%c0_1, %c0_2] : memref<32x64xbf16, #tpu.memory_space<vmem>>, vector<32x64xbf16>
    %cst = arith.constant dense<0.000000e+00> : vector<8x64xf32>
    %3 = tpu.matmul %1, %2, %cst {dimension_numbers = #tpu.dot_dimension_numbers<[1], [0], [0], [1], [0, 0, 1, 1], [], []>} : vector<8x32xbf16>, vector<32x64xbf16>, vector<8x64xf32> -> vector<8x64xf32>
    %c0_3 = arith.constant 0 : index
    %c0_4 = arith.constant 0 : index
    %4 = vector.load %arg4[%c0_3, %c0_4] : memref<1x64xf32, #tpu.memory_space<vmem>>, vector<1x64xf32>
    %5 = vector.broadcast %4 : vector<1x64xf32> to vector<8x64xf32>
    %6 = arith.addf %3, %5 : vector<8x64xf32>
    %cst_5 = arith.constant 0.000000e+00 : f32
    %7 = vector.broadcast %cst_5 : f32 to vector<8x64xf32>
    %8 = arith.maximumf %6, %7 : vector<8x64xf32>
    %9 = arith.truncf %8 : vector<8x64xf32> to vector<8x64xbf16>
    %c0_6 = arith.constant 0 : index
    %c0_7 = arith.constant 0 : index
    %10 = vector.load %arg5[%c0_6, %c0_7] : memref<64x32xbf16, #tpu.memory_space<vmem>>, vector<64x32xbf16>
    %cst_8 = arith.constant dense<0.000000e+00> : vector<8x32xf32>
    %11 = tpu.matmul %9, %10, %cst_8 {dimension_numbers = #tpu.dot_dimension_numbers<[1], [0], [0], [1], [0, 0, 1, 1], [], []>} : vector<8x64xbf16>, vector<64x32xbf16>, vector<8x32xf32> -> vector<8x32xf32>
    %c0_9 = arith.constant 0 : index
    %c0_10 = arith.constant 0 : index
    %12 = vector.load %arg6[%c0_9, %c0_10] : memref<1x32xf32, #tpu.memory_space<vmem>>, vector<1x32xf32>
    %13 = vector.broadcast %12 : vector<1x32xf32> to vector<8x32xf32>
    %14 = arith.addf %11, %13 : vector<8x32xf32>
    %15 = vector.extract_strided_slice %14 {offsets = [0, 0], sizes = [8, 16], strides = [1, 1]} : vector<8x32xf32> to vector<8x16xf32>
    %16 = vector.extract_strided_slice %14 {offsets = [0, 16], sizes = [8, 16], strides = [1, 1]} : vector<8x32xf32> to vector<8x16xf32>
    %c0_11 = arith.constant 0 : index
    %c0_12 = arith.constant 0 : index
    %17 = vector.load %arg2[%c0_11, %c0_12] : memref<8x16xf32, #tpu.memory_space<vmem>>, vector<8x16xf32>
    %cst_13 = arith.constant 5.000000e-01 : f32
    %18 = vector.broadcast %cst_13 : f32 to vector<8x16xf32>
    %19 = arith.mulf %18, %16 : vector<8x16xf32>
    %20 = math.exp %19 : vector<8x16xf32>
    %21 = arith.mulf %17, %20 : vector<8x16xf32>
    %22 = arith.addf %15, %21 : vector<8x16xf32>
    %23 = arith.truncf %22 : vector<8x16xf32> to vector<8x16xbf16>
    %c0_14 = arith.constant 0 : index
    %c0_15 = arith.constant 0 : index
    %24 = vector.load %arg7[%c0_14, %c0_15] : memref<16x64xbf16, #tpu.memory_space<vmem>>, vector<16x64xbf16>
    %cst_16 = arith.constant dense<0.000000e+00> : vector<8x64xf32>
    %25 = tpu.matmul %23, %24, %cst_16 {dimension_numbers = #tpu.dot_dimension_numbers<[1], [0], [0], [1], [0, 0, 1, 1], [], []>} : vector<8x16xbf16>, vector<16x64xbf16>, vector<8x64xf32> -> vector<8x64xf32>
    %c0_17 = arith.constant 0 : index
    %c0_18 = arith.constant 0 : index
    %26 = vector.load %arg8[%c0_17, %c0_18] : memref<1x64xf32, #tpu.memory_space<vmem>>, vector<1x64xf32>
    %27 = vector.broadcast %26 : vector<1x64xf32> to vector<8x64xf32>
    %28 = arith.addf %25, %27 : vector<8x64xf32>
    %cst_19 = arith.constant 0.000000e+00 : f32
    %29 = vector.broadcast %cst_19 : f32 to vector<8x64xf32>
    %30 = arith.maximumf %28, %29 : vector<8x64xf32>
    %31 = arith.truncf %30 : vector<8x64xf32> to vector<8x64xbf16>
    %c0_20 = arith.constant 0 : index
    %c0_21 = arith.constant 0 : index
    %32 = vector.load %arg9[%c0_20, %c0_21] : memref<64x32xbf16, #tpu.memory_space<vmem>>, vector<64x32xbf16>
    %cst_22 = arith.constant dense<0.000000e+00> : vector<8x32xf32>
    %33 = tpu.matmul %31, %32, %cst_22 {dimension_numbers = #tpu.dot_dimension_numbers<[1], [0], [0], [1], [0, 0, 1, 1], [], []>} : vector<8x64xbf16>, vector<64x32xbf16>, vector<8x32xf32> -> vector<8x32xf32>
    %c0_23 = arith.constant 0 : index
    %c0_24 = arith.constant 0 : index
    %34 = vector.load %arg10[%c0_23, %c0_24] : memref<1x32xf32, #tpu.memory_space<vmem>>, vector<1x32xf32>
    %35 = vector.broadcast %34 : vector<1x32xf32> to vector<8x32xf32>
    %36 = arith.addf %33, %35 : vector<8x32xf32>
    %c0_25 = arith.constant 0 : index
    %c0_26 = arith.constant 0 : index
    %37 = vector.load %arg11[%c0_25, %c0_26] : memref<8x64xf32, #tpu.memory_space<vmem>>, vector<8x32xf32>
    tpu.vector_store %arg11[%c0_25, %c0_26], %36 {strides = array<i32>} : memref<8x64xf32, #tpu.memory_space<vmem>>, vector<8x32xf32>,
    %c0_27 = arith.constant 0 : index
    %c32 = arith.constant 32 : index
    %38 = vector.load %arg11[%c0_27, %c32] : memref<8x64xf32, #tpu.memory_space<vmem>>, vector<8x32xf32>
    tpu.vector_store %arg11[%c0_27, %c32], %14 {strides = array<i32>} : memref<8x64xf32, #tpu.memory_space<vmem>>, vector<8x32xf32>,
    return
  }
  func.func @transform_0(%arg0: i32) -> (i32, i32) {
    %c0_i32 = arith.constant 0 : i32
    %c0_i32_0 = arith.constant 0 : i32
    return %arg0, %c0_i32 : i32, i32
  }
  func.func @transform_1(%arg0: i32) -> (i32, i32) {
    %c0_i32 = arith.constant 0 : i32
    %c0_i32_0 = arith.constant 0 : i32
    return %arg0, %c0_i32 : i32, i32
  }
  func.func @transform_2(%arg0: i32) -> (i32, i32) {
    %c0_i32 = arith.constant 0 : i32
    %c0_i32_0 = arith.constant 0 : i32
    %c0_i32_1 = arith.constant 0 : i32
    return %c0_i32, %c0_i32_0 : i32, i32
  }
  func.func @transform_3(%arg0: i32) -> (i32, i32) {
    %c0_i32 = arith.constant 0 : i32
    %c0_i32_0 = arith.constant 0 : i32
    %c0_i32_1 = arith.constant 0 : i32
    return %c0_i32, %c0_i32_0 : i32, i32
  }
  func.func @transform_4(%arg0: i32) -> (i32, i32) {
    %c0_i32 = arith.constant 0 : i32
    %c0_i32_0 = arith.constant 0 : i32
    %c0_i32_1 = arith.constant 0 : i32
    return %c0_i32, %c0_i32_0 : i32, i32
  }
  func.func @transform_5(%arg0: i32) -> (i32, i32) {
    %c0_i32 = arith.constant 0 : i32
    %c0_i32_0 = arith.constant 0 : i32
    %c0_i32_1 = arith.constant 0 : i32
    return %c0_i32, %c0_i32_0 : i32, i32
  }
  func.func @transform_6(%arg0: i32) -> (i32, i32) {
    %c0_i32 = arith.constant 0 : i32
    %c0_i32_0 = arith.constant 0 : i32
    %c0_i32_1 = arith.constant 0 : i32
    return %c0_i32, %c0_i32_0 : i32, i32
  }
  func.func @transform_7(%arg0: i32) -> (i32, i32) {
    %c0_i32 = arith.constant 0 : i32
    %c0_i32_0 = arith.constant 0 : i32
    %c0_i32_1 = arith.constant 0 : i32
    return %c0_i32, %c0_i32_0 : i32, i32
  }
  func.func @transform_8(%arg0: i32) -> (i32, i32) {
    %c0_i32 = arith.constant 0 : i32
    %c0_i32_0 = arith.constant 0 : i32
    %c0_i32_1 = arith.constant 0 : i32
    return %c0_i32, %c0_i32_0 : i32, i32
  }
  func.func @transform_9(%arg0: i32) -> (i32, i32) {
    %c0_i32 = arith.constant 0 : i32
    %c0_i32_0 = arith.constant 0 : i32
    %c0_i32_1 = arith.constant 0 : i32
    return %c0_i32, %c0_i32_0 : i32, i32
  }
  func.func @transform_10(%arg0: i32) -> (i32, i32) {
    %c0_i32 = arith.constant 0 : i32
    %c0_i32_0 = arith.constant 0 : i32
    return %arg0, %c0_i32 : i32, i32
  }
}

</mosaic_0001>

<llo_original>
// kernel: vae_forward.1
$region0: #{vae_forward.1}
  #allocation0 [shape = 'u32[]', space=smem, size = 0x4, offset = 0x4, fixed_abs, tag = 'smem constant byte address 0x4 - core index']
  #allocation1 [shape = 'u32[72,128]{1,0:T(1,128)}', space=vmem, size = 0x9000, scoped, tag = 'internal scratch']
  %s0 = inlined_call_operand.vmem [shape: f32[8,32], index: 0, kind: input, shape index: {}]
  %s1 = inlined_call_operand.vmem [shape: f32[8,16], index: 1, kind: input, shape index: {}]
  %s2 = inlined_call_operand.vmem [shape: bf16[32,64], index: 2, kind: input, shape index: {}]
  %s3 = inlined_call_operand.vmem [shape: f32[1,64], index: 3, kind: input, shape index: {}]
  %s4 = inlined_call_operand.vmem [shape: bf16[64,32], index: 4, kind: input, shape index: {}]
  %s5 = inlined_call_operand.vmem [shape: f32[1,32], index: 5, kind: input, shape index: {}]
  %s6 = inlined_call_operand.vmem [shape: bf16[16,64], index: 6, kind: input, shape index: {}]
  %s7 = inlined_call_operand.vmem [shape: f32[1,64], index: 7, kind: input, shape index: {}]
  %s8 = inlined_call_operand.vmem [shape: bf16[64,32], index: 8, kind: input, shape index: {}]
  %s9 = inlined_call_operand.vmem [shape: f32[1,32], index: 9, kind: input, shape index: {}]
  %s10 = inlined_call_operand.vmem [shape: f32[8,64], index: 10, kind: output, shape index: {}]
  %s11 = sld [smem:[#allocation0]]
  $region50: #{vae_forward.1} parent=0
    _
  %s13 = ssub.s32 1, %s11
  %s14 = scalar_select 0, %s13, %s11
  // Predicated region
  $region2: #{vae_forward.1} parent=0 // pred_check
    _
  $region3: #{vae_forward.1} parent=0 // pred_check_branch
    %16 = sbr.rel (0) target = $region5
  $region4: #{vae_forward.1} parent=0 // pred_region
    _
  $region5: #{vae_forward.1} parent=0 // pred_fallthru
    _
  // Predicated region
  $region6: #{vae_forward.1} parent=0 // pred_check
    _
  $region7: #{vae_forward.1} parent=0 // pred_check_branch
    %18 = sbr.rel (0) target = $region9
  $region8: #{vae_forward.1} parent=0 // pred_region
    _
  $region9: #{vae_forward.1} parent=0 // pred_fallthru
    _
  // Predicated region
  $region10: #{vae_forward.1} parent=0 // pred_check
    _
  $region11: #{vae_forward.1} parent=0 // pred_check_branch
    %20 = sbr.rel (0) target = $region13
  $region12: #{vae_forward.1} parent=0 // pred_region
    _
  $region13: #{vae_forward.1} parent=0 // pred_fallthru
    _
  // Predicated region
  $region14: #{vae_forward.1} parent=0 // pred_check
    _
  $region15: #{vae_forward.1} parent=0 // pred_check_branch
    %22 = sbr.rel (0) target = $region17
  $region16: #{vae_forward.1} parent=0 // pred_region
    _
  $region17: #{vae_forward.1} parent=0 // pred_fallthru
    _
  // Predicated region
  $region18: #{vae_forward.1} parent=0 // pred_check
    _
  $region19: #{vae_forward.1} parent=0 // pred_check_branch
    %24 = sbr.rel (0) target = $region21
  $region20: #{vae_forward.1} parent=0 // pred_region
    _
  $region21: #{vae_forward.1} parent=0 // pred_fallthru
    _
  // Predicated region
  $region22: #{vae_forward.1} parent=0 // pred_check
    _
  $region23: #{vae_forward.1} parent=0 // pred_check_branch
    %26 = sbr.rel (0) target = $region25
  $region24: #{vae_forward.1} parent=0 // pred_region
    _
  $region25: #{vae_forward.1} parent=0 // pred_fallthru
    _
  // Predicated region
  $region26: #{vae_forward.1} parent=0 // pred_check
    _
  $region27: #{vae_forward.1} parent=0 // pred_check_branch
    %28 = sbr.rel (0) target = $region29
  $region28: #{vae_forward.1} parent=0 // pred_region
    _
  $region29: #{vae_forward.1} parent=0 // pred_fallthru
    _
  // Predicated region
  $region30: #{vae_forward.1} parent=0 // pred_check
    _
  $region31: #{vae_forward.1} parent=0 // pred_check_branch
    %30 = sbr.rel (0) target = $region33
  $region32: #{vae_forward.1} parent=0 // pred_region
    _
  $region33: #{vae_forward.1} parent=0 // pred_fallthru
    _
  // Predicated region
  $region34: #{vae_forward.1} parent=0 // pred_check
    _
  $region35: #{vae_forward.1} parent=0 // pred_check_branch
    %32 = sbr.rel (0) target = $region37
  $region36: #{vae_forward.1} parent=0 // pred_region
    _
  $region37: #{vae_forward.1} parent=0 // pred_fallthru
    _
  // Predicated region
  $region38: #{vae_forward.1} parent=0 // pred_check
    _
  $region39: #{vae_forward.1} parent=0 // pred_check_branch
    %34 = sbr.rel (0) target = $region41
  $region40: #{vae_forward.1} parent=0 // pred_region
    _
  $region41: #{vae_forward.1} parent=0 // pred_fallthru
    _
  %v36 = vld [vmem:[%s0] sm:$0xff]
  %v37 = vpack.c.bf16 %v36, %v36
  %v38 = vld [vmem:[%s2] sm:$0xf]
  %v39 = vld [vmem:[%s2 + $0x4] sm:$0xf]
  %v40 = vld [vmem:[%s2 + $0x8] sm:$0xf]
  %v41 = vld [vmem:[%s2 + $0xc] sm:$0xf]
  %v42 = vld [vmem:[%s3] sm:$0x1]
  %v44 = vperm.slane %v42, 0
  %v50 = vunpack.c.l.b16 %v38
  %v51 = vunpack.c.l.b16 %v39
  %v52 = vunpack.c.l.b16 %v40
  %v53 = vunpack.c.l.b16 %v41
  %v54 = vpack.c.b16 %v51, %v50
  %v55 = vpack.c.b16 %v53, %v52
  %vm58 = vcmask 261120
  %v60 = vsel %vm58, %v37, 0
  %62 = vmatpush.bf16.msra.mxu0 0
  %63 = vmatpush.bf16.msra.mxu0 0
  %64 = vmatpush.bf16.msra.mxu0 0
  %65 = vmatpush.bf16.msra.mxu0 0
  %66 = vmatpush.bf16.msra.mxu0 0
  %67 = vmatpush.bf16.msra.mxu0 0
  %68 = vmatpush.bf16.msra.mxu0 %v55
  %69 = vmatpush.bf16.msra.mxu0 %v54
  %70 = vmatmul.bf16.gmra.mxu0 %v60
  %v71 = vpop.f32.mrf.mxu0
  %v72 = vadd.f32 %v44, %v71
  %v73 = vpop.f32.mrf.mxu0
  %74 = vdwg.mxu0
  %v75 = vmax.f32 %v72, 0.0
  %v76 = vpack.c.bf16 %v75, %v75
  %v77 = vld [vmem:[%s4] sm:$0xf]
  %v78 = vld [vmem:[%s4 + $0x4] sm:$0xf]
  %v79 = vld [vmem:[%s4 + $0x8] sm:$0xf]
  %v80 = vld [vmem:[%s4 + $0xc] sm:$0xf]
  %v81 = vld [vmem:[%s4 + $0x10] sm:$0xf]
  %v82 = vld [vmem:[%s4 + $0x14] sm:$0xf]
  %v83 = vld [vmem:[%s4 + $0x18] sm:$0xf]
  %v84 = vld [vmem:[%s4 + $0x1c] sm:$0xf]
  %v85 = vld [vmem:[%s5] sm:$0x1]
  %v87 = vperm.slane %v85, 0
  %v97 = vunpack.c.l.b16 %v77
  %v98 = vunpack.c.l.b16 %v78
  %v99 = vunpack.c.l.b16 %v79
  %v100 = vunpack.c.l.b16 %v80
  %v101 = vunpack.c.l.b16 %v81
  %v102 = vunpack.c.l.b16 %v82
  %v103 = vunpack.c.l.b16 %v83
  %v104 = vunpack.c.l.b16 %v84
  %v105 = vpack.c.b16 %v98, %v97
  %v106 = vpack.c.b16 %v100, %v99
  %v107 = vpack.c.b16 %v102, %v101
  %v108 = vpack.c.b16 %v104, %v103
  %vm113 = vcmask 523264
  %v115 = vsel %vm113, %v76, 0
  %117 = vmatpush.bf16.msra.mxu0 0
  %118 = vmatpush.bf16.msra.mxu0 0
  %119 = vmatpush.bf16.msra.mxu0 0
  %120 = vmatpush.bf16.msra.mxu0 0
  %121 = vmatpush.bf16.msra.mxu0 %v108
  %122 = vmatpush.bf16.msra.mxu0 %v107
  %123 = vmatpush.bf16.msra.mxu0 %v106
  %124 = vmatpush.bf16.msra.mxu0 %v105
  %125 = vmatmul.bf16.gmra.mxu0 %v115
  %v126 = vpop.f32.mrf.mxu0
  %v127 = vadd.f32 %v87, %v126
  %v128 = vpop.f32.mrf.mxu0
  %129 = vdwg.mxu0
  %v130 = vld [vmem:[%s1] sm:$0xff]
  %v131 = vmul.f32 %v127, 0.5
  %v132 = vmul.f32 %v131, 1.442695
  %v133 = vpow.pop %v132
  %135 = vrot.lane.b32.xlu0 %v133, 112
  %v136 = vpop.permute.xlu0 %135
  %v138 = vmul.f32 %v130, %v136
  %v139 = vadd.f32 %v127, %v138
  %v140 = vpack.c.bf16 %v139, %v139
  %v141 = vld [vmem:[%s6] sm:$0xf]
  %v142 = vld [vmem:[%s6 + $0x4] sm:$0xf]
  %v143 = vld [vmem:[%s7] sm:$0x1]
  %v145 = vperm.slane %v143, 0
  %v149 = vunpack.c.l.b16 %v141
  %v150 = vunpack.c.l.b16 %v142
  %v151 = vpack.c.b16 %v150, %v149
  %vm153 = vcmask 130048
  %v155 = vsel %vm153, %v140, 0
  %157 = vmatpush.bf16.msra.mxu0 0
  %158 = vmatpush.bf16.msra.mxu0 0
  %159 = vmatpush.bf16.msra.mxu0 0
  %160 = vmatpush.bf16.msra.mxu0 0
  %161 = vmatpush.bf16.msra.mxu0 0
  %162 = vmatpush.bf16.msra.mxu0 0
  %163 = vmatpush.bf16.msra.mxu0 0
  %164 = vmatpush.bf16.msra.mxu0 %v151
  %165 = vmatmul.bf16.gmra.mxu0 %v155
  %v166 = vpop.f32.mrf.mxu0
  %v167 = vadd.f32 %v145, %v166
  %v168 = vpop.f32.mrf.mxu0
  %169 = vdwg.mxu0
  %v170 = vmax.f32 %v167, 0.0
  %v171 = vpack.c.bf16 %v170, %v170
  %v172 = vld [vmem:[%s8] sm:$0xf]
  %v173 = vld [vmem:[%s8 + $0x4] sm:$0xf]
  %v174 = vld [vmem:[%s8 + $0x8] sm:$0xf]
  %v175 = vld [vmem:[%s8 + $0xc] sm:$0xf]
  %v176 = vld [vmem:[%s8 + $0x10] sm:$0xf]
  %v177 = vld [vmem:[%s8 + $0x14] sm:$0xf]
  %v178 = vld [vmem:[%s8 + $0x18] sm:$0xf]
  %v179 = vld [vmem:[%s8 + $0x1c] sm:$0xf]
  %v180 = vld [vmem:[%s9] sm:$0x1]
  %v182 = vperm.slane %v180, 0
  %v192 = vunpack.c.l.b16 %v172
  %v193 = vunpack.c.l.b16 %v173
  %v194 = vunpack.c.l.b16 %v174
  %v195 = vunpack.c.l.b16 %v175
  %v196 = vunpack.c.l.b16 %v176
  %v197 = vunpack.c.l.b16 %v177
  %v198 = vunpack.c.l.b16 %v178
  %v199 = vunpack.c.l.b16 %v179
  %v200 = vpack.c.b16 %v193, %v192
  %v201 = vpack.c.b16 %v195, %v194
  %v202 = vpack.c.b16 %v197, %v196
  %v203 = vpack.c.b16 %v199, %v198
  %v209 = vsel %vm113, %v171, 0
  %211 = vmatpush.bf16.msra.mxu0 0
  %212 = vmatpush.bf16.msra.mxu0 0
  %213 = vmatpush.bf16.msra.mxu0 0
  %214 = vmatpush.bf16.msra.mxu0 0
  %215 = vmatpush.bf16.msra.mxu0 %v203
  %216 = vmatpush.bf16.msra.mxu0 %v202
  %217 = vmatpush.bf16.msra.mxu0 %v201
  %218 = vmatpush.bf16.msra.mxu0 %v200
  %219 = vmatmul.bf16.gmra.mxu0 %v209
  %v220 = vpop.f32.mrf.mxu0
  %v221 = vadd.f32 %v182, %v220
  %v222 = vpop.f32.mrf.mxu0
  %223 = vdwg.mxu0
  %224 = vst.msk [vmem:[%s10] sm:$0xff] %vm58, %v221
  %226 = vrot.lane.b32.xlu0 %v127, 32
  %v227 = vpop.permute.xlu0 %226
  %vm229 = vcmask 523520
  %230 = vst.msk [vmem:[%s10] sm:$0xff] %vm229, %v227
  // Predicated region
  $region42: #{vae_forward.1} parent=0 // pred_check
    _
  $region43: #{vae_forward.1} parent=0 // pred_check_branch
    %232 = sbr.rel (0) target = $region45
  $region44: #{vae_forward.1} parent=0 // pred_region
    _
  $region45: #{vae_forward.1} parent=0 // pred_fallthru
    _
  // Predicated region
  $region46: #{vae_forward.1} parent=0 // pred_check
    _
  $region47: #{vae_forward.1} parent=0 // pred_check_branch
    %234 = sbr.rel (0) target = $region49
  $region48: #{vae_forward.1} parent=0 // pred_region
    _
  $region49: #{vae_forward.1} parent=0 // pred_fallthru
    _

</llo_original>
